<compile_context>
chip_gen: v6e
topology: v6e:2x2x1
jax: 0.10.0
libtpu: 0.0.40
codegen_flags: <defaults>
</compile_context>

<pallas_src>
import functools

import jax
import jax.numpy as jnp
from jax.experimental import pallas as pl
from jax.experimental.pallas import tpu as pltpu


def _encoder_kernel(x_ref, eps_ref,
                    w1, b1, w2, b2, w3, b3, w45, b45,
                    z_ref, kl_ref, *, latent_dims):
    """Fused VariationalEncoder forward for one batch tile (everything in VMEM)."""
    f32 = jnp.float32

    def dense(h, w_ref, b_ref):
        return (jnp.dot(h, w_ref[...].astype(f32), preferred_element_type=f32)
                + b_ref[...].astype(f32))

    relu = lambda v: jnp.maximum(v, 0.0)

    x = x_ref[...].astype(f32)                    # (TB, 64)
    h = relu(dense(x, w1, b1))                    # (TB, 32)
    h = relu(dense(h, w2, b2))                    # (TB, 16)
    h = relu(dense(h, w3, b3))                    # (TB, 16)

    heads = dense(h, w45, b45)                    # (TB, 2L): fused mu | logvar
    mu = heads[:, :latent_dims]
    logvar = heads[:, latent_dims:]

    sigma = jnp.exp(0.5 * logvar)
    z = mu + sigma * eps_ref[...].astype(f32)     # reparameterization
    z_ref[...] = z.astype(z_ref.dtype)

    # Per-row KL partials; the total KL is a cheap sum in the wrapper.
    kl_ref[...] = -0.5 * jnp.sum(1.0 + logvar - mu * mu - jnp.exp(logvar),
                                 axis=-1, keepdims=True)


def _round_up(n, m):
    return ((n + m - 1) // m) * m


def variational_encoder_forward(x, eps, params, *, tile_b=4096):
    """Returns (z, kl). x: anything flattening to (-1, 64); eps: (B, L) ~ N(0,1)."""
    x2d = x.reshape((-1, 64))                     # native dtype; cast happens in-kernel
    B = x2d.shape[0]
    w1, b1, w2, b2, w3, b3, w4, b4, w5, b5 = params
    latent_dims = w4.shape[1]

    # Fuse the mu / logvar heads into one (16, 2L) weight (tiny one-time concat).
    w45 = jnp.concatenate([w4, w5], axis=1)
    b45 = jnp.concatenate([b4, b5], axis=1)

    # Batch tiling: large tiles for HBM-roofline pipelining; pad the remainder.
    tb = min(tile_b, _round_up(B, 8))
    Bp = _round_up(B, tb)
    if Bp != B:
        x2d = jnp.pad(x2d, ((0, Bp - B), (0, 0)))
        eps = jnp.pad(eps, ((0, Bp - B), (0, 0)))
    grid = (Bp // tb,)

    def row_spec(width):                          # batch-tiled operand
        return pl.BlockSpec((tb, width), lambda i: (i, 0))

    def full_spec(arr):                           # VMEM-resident weight/bias
        return pl.BlockSpec(arr.shape, lambda i: (0, 0))

    weight_ops = [w1, b1, w2, b2, w3, b3, w45, b45]

    flops = 2 * Bp * (64 * 32 + 32 * 16 + 16 * 16 + 16 * 2 * latent_dims)
    bytes_io = (Bp * (64 + 2 * latent_dims + 1) * 4
                + sum(int(p.size) * 4 for p in weight_ops))
    cost = pl.CostEstimate(flops=flops,
                           transcendentals=2 * latent_dims * Bp,
                           bytes_accessed=bytes_io)

    z_pad, kl_rows = pl.pallas_call(
        functools.partial(_encoder_kernel, latent_dims=latent_dims),
        out_shape=(jax.ShapeDtypeStruct((Bp, latent_dims), jnp.float32),
                   jax.ShapeDtypeStruct((Bp, 1), jnp.float32)),
        grid_spec=pltpu.PrefetchScalarGridSpec(
            num_scalar_prefetch=0,
            grid=grid,
            in_specs=[row_spec(64), row_spec(latent_dims)]
                     + [full_spec(p) for p in weight_ops],
            out_specs=[row_spec(latent_dims), row_spec(1)],
        ),
        compiler_params=pltpu.CompilerParams(
            dimension_semantics=("parallel",)),
        cost_estimate=cost,
    )(x2d, eps, *weight_ops)

    z = z_pad[:B]
    kl = jnp.sum(kl_rows[:B, 0])
    return z, kl


def init_params(latent_dims, key):
    """Deterministic synthetic parameters matching the PyTorch module's shapes.

    Weights are (in, out) (i.e. nn.Linear weight transposed); biases are (1, out).
    """
    shapes = [(64, 32), (32, 16), (16, 16), (16, latent_dims), (16, latent_dims)]
    params = []
    for shp in shapes:
        key, kw, kb = jax.random.split(key, 3)
        bound = 1.0 / (shp[0] ** 0.5)             # PyTorch nn.Linear default init range
        w = jax.random.uniform(kw, shp, jnp.float32, -bound, bound)
        b = jax.random.uniform(kb, (1, shp[1]), jnp.float32, -bound, bound)
        params += [w, b]
    return params


def _reference(x, eps, params):
    """Pure-JAX reference of VariationalEncoder.forward (plus kl)."""
    x2d = x.reshape((-1, 64)).astype(jnp.float32)
    w1, b1, w2, b2, w3, b3, w4, b4, w5, b5 = [p.astype(jnp.float32) for p in params]
    h = jax.nn.relu(x2d @ w1 + b1)
    h = jax.nn.relu(h @ w2 + b2)
    h = jax.nn.relu(h @ w3 + b3)
    mu = h @ w4 + b4
    logvar = h @ w5 + b5
    sigma = jnp.exp(0.5 * logvar)
    z = mu + sigma * eps.astype(jnp.float32)
    kl = -0.5 * jnp.sum(1.0 + logvar - mu * mu - jnp.exp(logvar))
    return z, kl


if __name__ == "__main__":
    latent_dims = 8
    key = jax.random.PRNGKey(0)
    k_x, k_eps, k_p = jax.random.split(key, 3)

    # x flattens to (-1, 64): small (2, 8, 8) "board" input -> batch B = 2
    x = jax.random.uniform(k_x, (2, 8, 8), jnp.float32)
    B = x.reshape((-1, 64)).shape[0]
    # torch.distributions.Normal sampling has no in-kernel torch equivalent;
    # the standard-normal eps is passed in explicitly (deterministic here).
    eps = jax.random.normal(k_eps, (B, latent_dims), jnp.float32)

    params = init_params(latent_dims, k_p)

    z, kl = variational_encoder_forward(x, eps, params)
    z = jax.block_until_ready(z)
    kl = jax.block_until_ready(kl)

    assert z.shape == (B, latent_dims) and z.dtype == jnp.float32
    assert kl.shape == () and kl.dtype == jnp.float32
    assert bool(jnp.all(jnp.isfinite(z))) and bool(jnp.isfinite(kl))

    z_ref, kl_ref = _reference(x, eps, params)
    # Loose tolerances to absorb MXU matmul precision differences vs XLA reference.
    assert bool(jnp.allclose(z, z_ref, atol=2e-2, rtol=2e-2))
    assert bool(jnp.allclose(kl, kl_ref, atol=5e-2, rtol=5e-2))

    print("KERNEL_OK")
</pallas_src>

<mosaic_0001>
module attributes {stable_mosaic.version = 11 : i64} {
  func.func @_encoder_kernel(%arg0: i32, %arg1: memref<8x64xf32, #tpu.memory_space<vmem>>, %arg2: memref<8x8xf32, #tpu.memory_space<vmem>>, %arg3: memref<64x32xf32, #tpu.memory_space<vmem>>, %arg4: memref<1x32xf32, #tpu.memory_space<vmem>>, %arg5: memref<32x16xf32, #tpu.memory_space<vmem>>, %arg6: memref<1x16xf32, #tpu.memory_space<vmem>>, %arg7: memref<16x16xf32, #tpu.memory_space<vmem>>, %arg8: memref<1x16xf32, #tpu.memory_space<vmem>>, %arg9: memref<16x16xf32, #tpu.memory_space<vmem>>, %arg10: memref<1x16xf32, #tpu.memory_space<vmem>>, %arg11: memref<8x8xf32, #tpu.memory_space<vmem>>, %arg12: memref<8x1xf32, #tpu.memory_space<vmem>>) attributes {dimension_semantics = [#tpu.dimension_semantics<parallel>], iteration_bounds = array<i64: 1>, scalar_prefetch = 0 : i64, scratch_operands = 0 : i64, tpu.core_type = #tpu.core_type<tc>, window_params = [{transform_indices = @transform_0, window_bounds = array<i64: 8, 64>}, {transform_indices = @transform_1, window_bounds = array<i64: 8, 8>}, {pipeline_mode = #tpu.pipeline_mode<synchronous>, transform_indices = @transform_2, window_bounds = array<i64: 64, 32>}, {pipeline_mode = #tpu.pipeline_mode<synchronous>, transform_indices = @transform_3, window_bounds = array<i64: 1, 32>}, {pipeline_mode = #tpu.pipeline_mode<synchronous>, transform_indices = @transform_4, window_bounds = array<i64: 32, 16>}, {pipeline_mode = #tpu.pipeline_mode<synchronous>, transform_indices = @transform_5, window_bounds = array<i64: 1, 16>}, {pipeline_mode = #tpu.pipeline_mode<synchronous>, transform_indices = @transform_6, window_bounds = array<i64: 16, 16>}, {pipeline_mode = #tpu.pipeline_mode<synchronous>, transform_indices = @transform_7, window_bounds = array<i64: 1, 16>}, {pipeline_mode = #tpu.pipeline_mode<synchronous>, transform_indices = @transform_8, window_bounds = array<i64: 16, 16>}, {pipeline_mode = #tpu.pipeline_mode<synchronous>, transform_indices = @transform_9, window_bounds = array<i64: 1, 16>}, {transform_indices = @transform_10, window_bounds = array<i64: 8, 8>}, {transform_indices = @transform_11, window_bounds = array<i64: 8, 1>}]} {
    %c0 = arith.constant 0 : index
    %c0_0 = arith.constant 0 : index
    %0 = vector.load %arg1[%c0, %c0_0] : memref<8x64xf32, #tpu.memory_space<vmem>>, vector<8x64xf32>
    %c0_1 = arith.constant 0 : index
    %c0_2 = arith.constant 0 : index
    %1 = vector.load %arg3[%c0_1, %c0_2] : memref<64x32xf32, #tpu.memory_space<vmem>>, vector<64x32xf32>
    %cst = arith.constant dense<0.000000e+00> : vector<8x32xf32>
    %2 = tpu.matmul %0, %1, %cst {dimension_numbers = #tpu.dot_dimension_numbers<[1], [0], [0], [1], [0, 0, 1, 1], [], []>} : vector<8x64xf32>, vector<64x32xf32>, vector<8x32xf32> -> vector<8x32xf32>
    %c0_3 = arith.constant 0 : index
    %c0_4 = arith.constant 0 : index
    %3 = vector.load %arg4[%c0_3, %c0_4] : memref<1x32xf32, #tpu.memory_space<vmem>>, vector<1x32xf32>
    %4 = vector.broadcast %3 : vector<1x32xf32> to vector<8x32xf32>
    %5 = arith.addf %2, %4 : vector<8x32xf32>
    %cst_5 = arith.constant 0.000000e+00 : f32
    %6 = vector.broadcast %cst_5 : f32 to vector<8x32xf32>
    %7 = arith.maximumf %5, %6 : vector<8x32xf32>
    %c0_6 = arith.constant 0 : index
    %c0_7 = arith.constant 0 : index
    %8 = vector.load %arg5[%c0_6, %c0_7] : memref<32x16xf32, #tpu.memory_space<vmem>>, vector<32x16xf32>
    %cst_8 = arith.constant dense<0.000000e+00> : vector<8x16xf32>
    %9 = tpu.matmul %7, %8, %cst_8 {dimension_numbers = #tpu.dot_dimension_numbers<[1], [0], [0], [1], [0, 0, 1, 1], [], []>} : vector<8x32xf32>, vector<32x16xf32>, vector<8x16xf32> -> vector<8x16xf32>
    %c0_9 = arith.constant 0 : index
    %c0_10 = arith.constant 0 : index
    %10 = vector.load %arg6[%c0_9, %c0_10] : memref<1x16xf32, #tpu.memory_space<vmem>>, vector<1x16xf32>
    %11 = vector.broadcast %10 : vector<1x16xf32> to vector<8x16xf32>
    %12 = arith.addf %9, %11 : vector<8x16xf32>
    %cst_11 = arith.constant 0.000000e+00 : f32
    %13 = vector.broadcast %cst_11 : f32 to vector<8x16xf32>
    %14 = arith.maximumf %12, %13 : vector<8x16xf32>
    %c0_12 = arith.constant 0 : index
    %c0_13 = arith.constant 0 : index
    %15 = vector.load %arg7[%c0_12, %c0_13] : memref<16x16xf32, #tpu.memory_space<vmem>>, vector<16x16xf32>
    %cst_14 = arith.constant dense<0.000000e+00> : vector<8x16xf32>
    %16 = tpu.matmul %14, %15, %cst_14 {dimension_numbers = #tpu.dot_dimension_numbers<[1], [0], [0], [1], [0, 0, 1, 1], [], []>} : vector<8x16xf32>, vector<16x16xf32>, vector<8x16xf32> -> vector<8x16xf32>
    %c0_15 = arith.constant 0 : index
    %c0_16 = arith.constant 0 : index
    %17 = vector.load %arg8[%c0_15, %c0_16] : memref<1x16xf32, #tpu.memory_space<vmem>>, vector<1x16xf32>
    %18 = vector.broadcast %17 : vector<1x16xf32> to vector<8x16xf32>
    %19 = arith.addf %16, %18 : vector<8x16xf32>
    %cst_17 = arith.constant 0.000000e+00 : f32
    %20 = vector.broadcast %cst_17 : f32 to vector<8x16xf32>
    %21 = arith.maximumf %19, %20 : vector<8x16xf32>
    %c0_18 = arith.constant 0 : index
    %c0_19 = arith.constant 0 : index
    %22 = vector.load %arg9[%c0_18, %c0_19] : memref<16x16xf32, #tpu.memory_space<vmem>>, vector<16x16xf32>
    %cst_20 = arith.constant dense<0.000000e+00> : vector<8x16xf32>
    %23 = tpu.matmul %21, %22, %cst_20 {dimension_numbers = #tpu.dot_dimension_numbers<[1], [0], [0], [1], [0, 0, 1, 1], [], []>} : vector<8x16xf32>, vector<16x16xf32>, vector<8x16xf32> -> vector<8x16xf32>
    %c0_21 = arith.constant 0 : index
    %c0_22 = arith.constant 0 : index
    %24 = vector.load %arg10[%c0_21, %c0_22] : memref<1x16xf32, #tpu.memory_space<vmem>>, vector<1x16xf32>
    %25 = vector.broadcast %24 : vector<1x16xf32> to vector<8x16xf32>
    %26 = arith.addf %23, %25 : vector<8x16xf32>
    %27 = vector.extract_strided_slice %26 {offsets = [0, 0], sizes = [8, 8], strides = [1, 1]} : vector<8x16xf32> to vector<8x8xf32>
    %28 = vector.extract_strided_slice %26 {offsets = [0, 8], sizes = [8, 8], strides = [1, 1]} : vector<8x16xf32> to vector<8x8xf32>
    %cst_23 = arith.constant 5.000000e-01 : f32
    %29 = vector.broadcast %cst_23 : f32 to vector<8x8xf32>
    %30 = arith.mulf %29, %28 : vector<8x8xf32>
    %31 = math.exp %30 : vector<8x8xf32>
    %c0_24 = arith.constant 0 : index
    %c0_25 = arith.constant 0 : index
    %32 = vector.load %arg2[%c0_24, %c0_25] : memref<8x8xf32, #tpu.memory_space<vmem>>, vector<8x8xf32>
    %33 = arith.mulf %31, %32 : vector<8x8xf32>
    %34 = arith.addf %27, %33 : vector<8x8xf32>
    %c0_26 = arith.constant 0 : index
    %c0_27 = arith.constant 0 : index
    %35 = vector.load %arg11[%c0_26, %c0_27] : memref<8x8xf32, #tpu.memory_space<vmem>>, vector<8x8xf32>
    tpu.vector_store %arg11[%c0_26, %c0_27], %34 {strides = array<i32>} : memref<8x8xf32, #tpu.memory_space<vmem>>, vector<8x8xf32>,
    %cst_28 = arith.constant 1.000000e+00 : f32
    %36 = vector.broadcast %cst_28 : f32 to vector<8x8xf32>
    %37 = arith.addf %36, %28 : vector<8x8xf32>
    %38 = arith.mulf %27, %27 : vector<8x8xf32>
    %39 = arith.subf %37, %38 : vector<8x8xf32>
    %40 = math.exp %28 : vector<8x8xf32>
    %41 = arith.subf %39, %40 : vector<8x8xf32>
    %cst_29 = arith.constant dense<0.000000e+00> : vector<8xf32>
    %42 = vector.multi_reduction <add>, %41, %cst_29 [1] : vector<8x8xf32> to vector<8xf32>
    %43 = vector.shape_cast %42 : vector<8xf32> to vector<8x1xf32>
    %cst_30 = arith.constant -5.000000e-01 : f32
    %44 = vector.broadcast %cst_30 : f32 to vector<8x1xf32>
    %45 = arith.mulf %44, %43 : vector<8x1xf32>
    %c0_31 = arith.constant 0 : index
    %c0_32 = arith.constant 0 : index
    %46 = vector.load %arg12[%c0_31, %c0_32] : memref<8x1xf32, #tpu.memory_space<vmem>>, vector<8x1xf32>
    tpu.vector_store %arg12[%c0_31, %c0_32], %45 {strides = array<i32>} : memref<8x1xf32, #tpu.memory_space<vmem>>, vector<8x1xf32>,
    return
  }
  func.func @transform_0(%arg0: i32) -> (i32, i32) {
    %c0_i32 = arith.constant 0 : i32
    %c0_i32_0 = arith.constant 0 : i32
    return %arg0, %c0_i32 : i32, i32
  }
  func.func @transform_1(%arg0: i32) -> (i32, i32) {
    %c0_i32 = arith.constant 0 : i32
    %c0_i32_0 = arith.constant 0 : i32
    return %arg0, %c0_i32 : i32, i32
  }
  func.func @transform_2(%arg0: i32) -> (i32, i32) {
    %c0_i32 = arith.constant 0 : i32
    %c0_i32_0 = arith.constant 0 : i32
    %c0_i32_1 = arith.constant 0 : i32
    return %c0_i32, %c0_i32_0 : i32, i32
  }
  func.func @transform_3(%arg0: i32) -> (i32, i32) {
    %c0_i32 = arith.constant 0 : i32
    %c0_i32_0 = arith.constant 0 : i32
    %c0_i32_1 = arith.constant 0 : i32
    return %c0_i32, %c0_i32_0 : i32, i32
  }
  func.func @transform_4(%arg0: i32) -> (i32, i32) {
    %c0_i32 = arith.constant 0 : i32
    %c0_i32_0 = arith.constant 0 : i32
    %c0_i32_1 = arith.constant 0 : i32
    return %c0_i32, %c0_i32_0 : i32, i32
  }
  func.func @transform_5(%arg0: i32) -> (i32, i32) {
    %c0_i32 = arith.constant 0 : i32
    %c0_i32_0 = arith.constant 0 : i32
    %c0_i32_1 = arith.constant 0 : i32
    return %c0_i32, %c0_i32_0 : i32, i32
  }
  func.func @transform_6(%arg0: i32) -> (i32, i32) {
    %c0_i32 = arith.constant 0 : i32
    %c0_i32_0 = arith.constant 0 : i32
    %c0_i32_1 = arith.constant 0 : i32
    return %c0_i32, %c0_i32_0 : i32, i32
  }
  func.func @transform_7(%arg0: i32) -> (i32, i32) {
    %c0_i32 = arith.constant 0 : i32
    %c0_i32_0 = arith.constant 0 : i32
    %c0_i32_1 = arith.constant 0 : i32
    return %c0_i32, %c0_i32_0 : i32, i32
  }
  func.func @transform_8(%arg0: i32) -> (i32, i32) {
    %c0_i32 = arith.constant 0 : i32
    %c0_i32_0 = arith.constant 0 : i32
    %c0_i32_1 = arith.constant 0 : i32
    return %c0_i32, %c0_i32_0 : i32, i32
  }
  func.func @transform_9(%arg0: i32) -> (i32, i32) {
    %c0_i32 = arith.constant 0 : i32
    %c0_i32_0 = arith.constant 0 : i32
    %c0_i32_1 = arith.constant 0 : i32
    return %c0_i32, %c0_i32_0 : i32, i32
  }
  func.func @transform_10(%arg0: i32) -> (i32, i32) {
    %c0_i32 = arith.constant 0 : i32
    %c0_i32_0 = arith.constant 0 : i32
    return %arg0, %c0_i32 : i32, i32
  }
  func.func @transform_11(%arg0: i32) -> (i32, i32) {
    %c0_i32 = arith.constant 0 : i32
    %c0_i32_0 = arith.constant 0 : i32
    return %arg0, %c0_i32 : i32, i32
  }
}

</mosaic_0001>

<llo_original>
// kernel: tpu_custom_call.1
$region0: #{tpu_custom_call.1}
  #allocation0 [shape = 'u32[]', space=smem, size = 0x4, offset = 0x4, fixed_abs, tag = 'smem constant byte address 0x4 - core index']
  #allocation1 [shape = 'u32[144,128]{1,0:T(1,128)}', space=vmem, size = 0x12000, scoped, tag = 'internal scratch']
  %s0 = inlined_call_operand.vmem [shape: f32[8,64], index: 0, kind: input, shape index: {}]
  %s1 = inlined_call_operand.vmem [shape: f32[8,8], index: 1, kind: input, shape index: {}]
  %s2 = inlined_call_operand.vmem [shape: f32[64,32], index: 2, kind: input, shape index: {}]
  %s3 = inlined_call_operand.vmem [shape: f32[1,32], index: 3, kind: input, shape index: {}]
  %s4 = inlined_call_operand.vmem [shape: f32[32,16], index: 4, kind: input, shape index: {}]
  %s5 = inlined_call_operand.vmem [shape: f32[1,16], index: 5, kind: input, shape index: {}]
  %s6 = inlined_call_operand.vmem [shape: f32[16,16], index: 6, kind: input, shape index: {}]
  %s7 = inlined_call_operand.vmem [shape: f32[1,16], index: 7, kind: input, shape index: {}]
  %s8 = inlined_call_operand.vmem [shape: f32[16,16], index: 8, kind: input, shape index: {}]
  %s9 = inlined_call_operand.vmem [shape: f32[1,16], index: 9, kind: input, shape index: {}]
  %s10 = inlined_call_operand.hbm [shape: f32[8,8], index: 10, kind: output, shape index: {0}]
  %s11 = inlined_call_operand.vmem [shape: f32[8,1], index: 11, kind: output, shape index: {1}]
  %12 = xla_tuple %s10, %s11
  %s13 = sld [smem:[#allocation0]]
  $region58: #{tpu_custom_call.1} parent=0
    _
  %s15 = ssub.s32 1, %s13
  %s16 = scalar_select 0, %s15, %s13
  $region1: #{tpu_custom_call.1} parent=0
    #allocation2 [shape = 'u8[4096]{0}', space=vmem, size = 0x1000, scoped, tag = 'output window, operand 0, single buffered']
    #allocation3 [shape = 's32[1]{0}', space=sflag, size = 0x4, scoped, tag = 'scoped memory for tpu_custom_call.1']
    %17 = vsyncpa [#allocation3], 0
    // Predicated region
    $region2: #{tpu_custom_call.1} parent=1 // pred_check
      _
    $region3: #{tpu_custom_call.1} parent=1 // pred_check_branch
      %19 = sbr.rel (0) target = $region5
    $region4: #{tpu_custom_call.1} parent=1 // pred_region
      _
    $region5: #{tpu_custom_call.1} parent=1 // pred_fallthru
      _
    // Predicated region
    $region6: #{tpu_custom_call.1} parent=1 // pred_check
      _
    $region7: #{tpu_custom_call.1} parent=1 // pred_check_branch
      %21 = sbr.rel (0) target = $region9
    $region8: #{tpu_custom_call.1} parent=1 // pred_region
      _
    $region9: #{tpu_custom_call.1} parent=1 // pred_fallthru
      _
    // Predicated region
    $region10: #{tpu_custom_call.1} parent=1 // pred_check
      _
    $region11: #{tpu_custom_call.1} parent=1 // pred_check_branch
      %23 = sbr.rel (0) target = $region13
    $region12: #{tpu_custom_call.1} parent=1 // pred_region
      _
    $region13: #{tpu_custom_call.1} parent=1 // pred_fallthru
      _
    // Predicated region
    $region14: #{tpu_custom_call.1} parent=1 // pred_check
      _
    $region15: #{tpu_custom_call.1} parent=1 // pred_check_branch
      %25 = sbr.rel (0) target = $region17
    $region16: #{tpu_custom_call.1} parent=1 // pred_region
      _
    $region17: #{tpu_custom_call.1} parent=1 // pred_fallthru
      _
    // Predicated region
    $region18: #{tpu_custom_call.1} parent=1 // pred_check
      _
    $region19: #{tpu_custom_call.1} parent=1 // pred_check_branch
      %27 = sbr.rel (0) target = $region21
    $region20: #{tpu_custom_call.1} parent=1 // pred_region
      _
    $region21: #{tpu_custom_call.1} parent=1 // pred_fallthru
      _
    // Predicated region
    $region22: #{tpu_custom_call.1} parent=1 // pred_check
      _
    $region23: #{tpu_custom_call.1} parent=1 // pred_check_branch
      %29 = sbr.rel (0) target = $region25
    $region24: #{tpu_custom_call.1} parent=1 // pred_region
      _
    $region25: #{tpu_custom_call.1} parent=1 // pred_fallthru
      _
    // Predicated region
    $region26: #{tpu_custom_call.1} parent=1 // pred_check
      _
    $region27: #{tpu_custom_call.1} parent=1 // pred_check_branch
      %31 = sbr.rel (0) target = $region29
    $region28: #{tpu_custom_call.1} parent=1 // pred_region
      _
    $region29: #{tpu_custom_call.1} parent=1 // pred_fallthru
      _
    // Predicated region
    $region30: #{tpu_custom_call.1} parent=1 // pred_check
      _
    $region31: #{tpu_custom_call.1} parent=1 // pred_check_branch
      %33 = sbr.rel (0) target = $region33
    $region32: #{tpu_custom_call.1} parent=1 // pred_region
      _
    $region33: #{tpu_custom_call.1} parent=1 // pred_fallthru
      _
    // Predicated region
    $region34: #{tpu_custom_call.1} parent=1 // pred_check
      _
    $region35: #{tpu_custom_call.1} parent=1 // pred_check_branch
      %35 = sbr.rel (0) target = $region37
    $region36: #{tpu_custom_call.1} parent=1 // pred_region
      _
    $region37: #{tpu_custom_call.1} parent=1 // pred_fallthru
      _
    // Predicated region
    $region38: #{tpu_custom_call.1} parent=1 // pred_check
      _
    $region39: #{tpu_custom_call.1} parent=1 // pred_check_branch
      %37 = sbr.rel (0) target = $region41
    $region40: #{tpu_custom_call.1} parent=1 // pred_region
      _
    $region41: #{tpu_custom_call.1} parent=1 // pred_fallthru
      _
    %v38 = vld [vmem:[%s0] sm:$0xff]
    %v39 = vld [vmem:[%s2] sm:$0xff]
    %v40 = vld [vmem:[%s2 + $0x8] sm:$0xff]
    %v41 = vld [vmem:[%s2 + $0x10] sm:$0xff]
    %v42 = vld [vmem:[%s2 + $0x18] sm:$0xff]
    %v43 = vld [vmem:[%s2 + $0x20] sm:$0xff]
    %v44 = vld [vmem:[%s2 + $0x28] sm:$0xff]
    %v45 = vld [vmem:[%s2 + $0x30] sm:$0xff]
    %v46 = vld [vmem:[%s2 + $0x38] sm:$0xff]
    %v47 = vld [vmem:[%s3] sm:$0x1]
    %v49 = vlaneseq
    %v50 = vshrl.u32 %v49, 7
    %v51 = vsub.s32 0, %v50
    %v52 = vrot.slane %v47, %v51
    %vm54 = vcmask 523264
    %v56 = vsel %vm54, %v38, 0
    %58 = vmatprep.subr.mxu0 0.0
    %59 = vmatpush1.msra.mxu0 0.0
    %60 = vmatprep.subr.mxu0 0.0
    %61 = vmatpush1.msra.mxu0 0.0
    %62 = vmatprep.subr.mxu0 0.0
    %63 = vmatpush1.msra.mxu0 0.0
    %64 = vmatprep.subr.mxu0 0.0
    %65 = vmatpush1.msra.mxu0 0.0
    %66 = vmatprep.subr.mxu0 0.0
    %67 = vmatpush1.msra.mxu0 0.0
    %68 = vmatprep.subr.mxu0 0.0
    %69 = vmatpush1.msra.mxu0 0.0
    %70 = vmatprep.subr.mxu0 0.0
    %71 = vmatpush1.msra.mxu0 0.0
    %72 = vmatprep.subr.mxu0 0.0
    %73 = vmatpush1.msra.mxu0 0.0
    %74 = vmatprep.subr.mxu0 0.0
    %75 = vmatpush1.msra.mxu0 %v46
    %76 = vmatprep.subr.mxu0 0.0
    %77 = vmatpush1.msra.mxu0 %v45
    %78 = vmatprep.subr.mxu0 0.0
    %79 = vmatpush1.msra.mxu0 %v44
    %80 = vmatprep.subr.mxu0 0.0
    %81 = vmatpush1.msra.mxu0 %v43
    %82 = vmatprep.subr.mxu0 0.0
    %83 = vmatpush1.msra.mxu0 %v42
    %84 = vmatprep.subr.mxu0 0.0
    %85 = vmatpush1.msra.mxu0 %v41
    %86 = vmatprep.subr.mxu0 0.0
    %87 = vmatpush1.msra.mxu0 %v40
    %88 = vmatprep.subr.mxu0 0.0
    %89 = vmatpush1.msra.mxu0 %v39
    %90 = vmatprep.subr.mxu0 0.0
    %91 = vmatpush2.msra.mxu0 0.0
    %92 = vmatprep.subr.mxu0 0.0
    %93 = vmatpush2.msra.mxu0 0.0
    %94 = vmatprep.subr.mxu0 0.0
    %95 = vmatpush2.msra.mxu0 0.0
    %96 = vmatprep.subr.mxu0 0.0
    %97 = vmatpush2.msra.mxu0 0.0
    %98 = vmatprep.subr.mxu0 0.0
    %99 = vmatpush2.msra.mxu0 0.0
    %100 = vmatprep.subr.mxu0 0.0
    %101 = vmatpush2.msra.mxu0 0.0
    %102 = vmatprep.subr.mxu0 0.0
    %103 = vmatpush2.msra.mxu0 0.0
    %104 = vmatprep.subr.mxu0 0.0
    %105 = vmatpush2.msra.mxu0 0.0
    %106 = vmatprep.subr.mxu0 0.0
    %107 = vmatpush2.msra.mxu0 0.0
    %108 = vmatprep.subr.mxu0 0.0
    %109 = vmatpush2.msra.mxu0 0.0
    %110 = vmatprep.subr.mxu0 0.0
    %111 = vmatpush2.msra.mxu0 0.0
    %112 = vmatprep.subr.mxu0 0.0
    %113 = vmatpush2.msra.mxu0 0.0
    %114 = vmatprep.subr.mxu0 0.0
    %115 = vmatpush2.msra.mxu0 0.0
    %116 = vmatprep.subr.mxu0 0.0
    %117 = vmatpush2.msra.mxu0 0.0
    %118 = vmatprep.subr.mxu0 0.0
    %119 = vmatpush2.msra.mxu0 0.0
    %120 = vmatprep.subr.mxu0 0.0
    %121 = vmatpush2.msra.mxu0 0.0
    %122 = vmatprep.mubr.f32.mxu0 0.0
    %123 = vmatmul.mubr.f32.gmra.mxu0 %v56
    %v124 = vpop.f32.mrf.mxu0
    %v125 = vadd.f32 %v52, %v124
    %v126 = vpop.f32.mrf.mxu0
    %127 = vdwg.mxu0
    %v128 = vmax.f32 %v125, 0.0
    %v129 = vld [vmem:[%s4] sm:$0xff]
    %v130 = vld [vmem:[%s4 + $0x8] sm:$0xff]
    %v131 = vld [vmem:[%s4 + $0x10] sm:$0xff]
    %v132 = vld [vmem:[%s4 + $0x18] sm:$0xff]
    %v133 = vld [vmem:[%s5] sm:$0x1]
    %v135 = vlaneseq
    %v136 = vshrl.u32 %v135, 7
    %v137 = vsub.s32 0, %v136
    %v138 = vrot.slane %v133, %v137
    %vm140 = vcmask 261120
    %v142 = vsel %vm140, %v128, 0
    %144 = vmatprep.subr.mxu0 0.0
    %145 = vmatpush1.msra.mxu0 0.0
    %146 = vmatprep.subr.mxu0 0.0
    %147 = vmatpush1.msra.mxu0 0.0
    %148 = vmatprep.subr.mxu0 0.0
    %149 = vmatpush1.msra.mxu0 0.0
    %150 = vmatprep.subr.mxu0 0.0
    %151 = vmatpush1.msra.mxu0 0.0
    %152 = vmatprep.subr.mxu0 0.0
    %153 = vmatpush1.msra.mxu0 0.0
    %154 = vmatprep.subr.mxu0 0.0
    %155 = vmatpush1.msra.mxu0 0.0
    %156 = vmatprep.subr.mxu0 0.0
    %157 = vmatpush1.msra.mxu0 0.0
    %158 = vmatprep.subr.mxu0 0.0
    %159 = vmatpush1.msra.mxu0 0.0
    %160 = vmatprep.subr.mxu0 0.0
    %161 = vmatpush1.msra.mxu0 0.0
    %162 = vmatprep.subr.mxu0 0.0
    %163 = vmatpush1.msra.mxu0 0.0
    %164 = vmatprep.subr.mxu0 0.0
    %165 = vmatpush1.msra.mxu0 0.0
    %166 = vmatprep.subr.mxu0 0.0
    %167 = vmatpush1.msra.mxu0 0.0
    %168 = vmatprep.subr.mxu0 0.0
    %169 = vmatpush1.msra.mxu0 %v132
    %170 = vmatprep.subr.mxu0 0.0
    %171 = vmatpush1.msra.mxu0 %v131
    %172 = vmatprep.subr.mxu0 0.0
    %173 = vmatpush1.msra.mxu0 %v130
    %174 = vmatprep.subr.mxu0 0.0
    %175 = vmatpush1.msra.mxu0 %v129
    %176 = vmatprep.subr.mxu0 0.0
    %177 = vmatpush2.msra.mxu0 0.0
    %178 = vmatprep.subr.mxu0 0.0
    %179 = vmatpush2.msra.mxu0 0.0
    %180 = vmatprep.subr.mxu0 0.0
    %181 = vmatpush2.msra.mxu0 0.0
    %182 = vmatprep.subr.mxu0 0.0
    %183 = vmatpush2.msra.mxu0 0.0
    %184 = vmatprep.subr.mxu0 0.0
    %185 = vmatpush2.msra.mxu0 0.0
    %186 = vmatprep.subr.mxu0 0.0
    %187 = vmatpush2.msra.mxu0 0.0
    %188 = vmatprep.subr.mxu0 0.0
    %189 = vmatpush2.msra.mxu0 0.0
    %190 = vmatprep.subr.mxu0 0.0
    %191 = vmatpush2.msra.mxu0 0.0
    %192 = vmatprep.subr.mxu0 0.0
    %193 = vmatpush2.msra.mxu0 0.0
    %194 = vmatprep.subr.mxu0 0.0
    %195 = vmatpush2.msra.mxu0 0.0
    %196 = vmatprep.subr.mxu0 0.0
    %197 = vmatpush2.msra.mxu0 0.0
    %198 = vmatprep.subr.mxu0 0.0
    %199 = vmatpush2.msra.mxu0 0.0
    %200 = vmatprep.subr.mxu0 0.0
    %201 = vmatpush2.msra.mxu0 0.0
    %202 = vmatprep.subr.mxu0 0.0
    %203 = vmatpush2.msra.mxu0 0.0
    %204 = vmatprep.subr.mxu0 0.0
    %205 = vmatpush2.msra.mxu0 0.0
    %206 = vmatprep.subr.mxu0 0.0
    %207 = vmatpush2.msra.mxu0 0.0
    %208 = vmatprep.mubr.f32.mxu0 0.0
    %209 = vmatmul.mubr.f32.gmra.mxu0 %v142
    %v210 = vpop.f32.mrf.mxu0
    %v211 = vadd.f32 %v138, %v210
    %v212 = vpop.f32.mrf.mxu0
    %213 = vdwg.mxu0
    %v214 = vmax.f32 %v211, 0.0
    %v215 = vld [vmem:[%s6] sm:$0xff]
    %v216 = vld [vmem:[%s6 + $0x8] sm:$0xff]
    %v217 = vld [vmem:[%s7] sm:$0x1]
    %v219 = vlaneseq
    %v220 = vshrl.u32 %v219, 7
    %v221 = vsub.s32 0, %v220
    %v222 = vrot.slane %v217, %v221
    %vm224 = vcmask 130048
    %v226 = vsel %vm224, %v214, 0
    %228 = vmatprep.subr.mxu0 0.0
    %229 = vmatpush1.msra.mxu0 0.0
    %230 = vmatprep.subr.mxu0 0.0
    %231 = vmatpush1.msra.mxu0 0.0
    %232 = vmatprep.subr.mxu0 0.0
    %233 = vmatpush1.msra.mxu0 0.0
    %234 = vmatprep.subr.mxu0 0.0
    %235 = vmatpush1.msra.mxu0 0.0
    %236 = vmatprep.subr.mxu0 0.0
    %237 = vmatpush1.msra.mxu0 0.0
    %238 = vmatprep.subr.mxu0 0.0
    %239 = vmatpush1.msra.mxu0 0.0
    %240 = vmatprep.subr.mxu0 0.0
    %241 = vmatpush1.msra.mxu0 0.0
    %242 = vmatprep.subr.mxu0 0.0
    %243 = vmatpush1.msra.mxu0 0.0
    %244 = vmatprep.subr.mxu0 0.0
    %245 = vmatpush1.msra.mxu0 0.0
    %246 = vmatprep.subr.mxu0 0.0
    %247 = vmatpush1.msra.mxu0 0.0
    %248 = vmatprep.subr.mxu0 0.0
    %249 = vmatpush1.msra.mxu0 0.0
    %250 = vmatprep.subr.mxu0 0.0
    %251 = vmatpush1.msra.mxu0 0.0
    %252 = vmatprep.subr.mxu0 0.0
    %253 = vmatpush1.msra.mxu0 0.0
    %254 = vmatprep.subr.mxu0 0.0
    %255 = vmatpush1.msra.mxu0 0.0
    %256 = vmatprep.subr.mxu0 0.0
    %257 = vmatpush1.msra.mxu0 %v216
    %258 = vmatprep.subr.mxu0 0.0
    %259 = vmatpush1.msra.mxu0 %v215
    %260 = vmatprep.subr.mxu0 0.0
    %261 = vmatpush2.msra.mxu0 0.0
    %262 = vmatprep.subr.mxu0 0.0
    %263 = vmatpush2.msra.mxu0 0.0
    %264 = vmatprep.subr.mxu0 0.0
    %265 = vmatpush2.msra.mxu0 0.0
    %266 = vmatprep.subr.mxu0 0.0
    %267 = vmatpush2.msra.mxu0 0.0
    %268 = vmatprep.subr.mxu0 0.0
    %269 = vmatpush2.msra.mxu0 0.0
    %270 = vmatprep.subr.mxu0 0.0
    %271 = vmatpush2.msra.mxu0 0.0
    %272 = vmatprep.subr.mxu0 0.0
    %273 = vmatpush2.msra.mxu0 0.0
    %274 = vmatprep.subr.mxu0 0.0
    %275 = vmatpush2.msra.mxu0 0.0
    %276 = vmatprep.subr.mxu0 0.0
    %277 = vmatpush2.msra.mxu0 0.0
    %278 = vmatprep.subr.mxu0 0.0
    %279 = vmatpush2.msra.mxu0 0.0
    %280 = vmatprep.subr.mxu0 0.0
    %281 = vmatpush2.msra.mxu0 0.0
    %282 = vmatprep.subr.mxu0 0.0
    %283 = vmatpush2.msra.mxu0 0.0
    %284 = vmatprep.subr.mxu0 0.0
    %285 = vmatpush2.msra.mxu0 0.0
    %286 = vmatprep.subr.mxu0 0.0
    %287 = vmatpush2.msra.mxu0 0.0
    %288 = vmatprep.subr.mxu0 0.0
    %289 = vmatpush2.msra.mxu0 0.0
    %290 = vmatprep.subr.mxu0 0.0
    %291 = vmatpush2.msra.mxu0 0.0
    %292 = vmatprep.mubr.f32.mxu0 0.0
    %293 = vmatmul.mubr.f32.gmra.mxu0 %v226
    %v294 = vpop.f32.mrf.mxu0
    %v295 = vadd.f32 %v222, %v294
    %v296 = vpop.f32.mrf.mxu0
    %297 = vdwg.mxu0
    %v298 = vmax.f32 %v295, 0.0
    %v299 = vld [vmem:[%s8] sm:$0xff]
    %v300 = vld [vmem:[%s8 + $0x8] sm:$0xff]
    %v301 = vld [vmem:[%s9] sm:$0x1]
    %v303 = vlaneseq
    %v304 = vshrl.u32 %v303, 7
    %v305 = vsub.s32 0, %v304
    %v306 = vrot.slane %v301, %v305
    %v309 = vsel %vm224, %v298, 0
    %311 = vmatprep.subr.mxu0 0.0
    %312 = vmatpush1.msra.mxu0 0.0
    %313 = vmatprep.subr.mxu0 0.0
    %314 = vmatpush1.msra.mxu0 0.0
    %315 = vmatprep.subr.mxu0 0.0
    %316 = vmatpush1.msra.mxu0 0.0
    %317 = vmatprep.subr.mxu0 0.0
    %318 = vmatpush1.msra.mxu0 0.0
    %319 = vmatprep.subr.mxu0 0.0
    %320 = vmatpush1.msra.mxu0 0.0
    %321 = vmatprep.subr.mxu0 0.0
    %322 = vmatpush1.msra.mxu0 0.0
    %323 = vmatprep.subr.mxu0 0.0
    %324 = vmatpush1.msra.mxu0 0.0
    %325 = vmatprep.subr.mxu0 0.0
    %326 = vmatpush1.msra.mxu0 0.0
    %327 = vmatprep.subr.mxu0 0.0
    %328 = vmatpush1.msra.mxu0 0.0
    %329 = vmatprep.subr.mxu0 0.0
    %330 = vmatpush1.msra.mxu0 0.0
    %331 = vmatprep.subr.mxu0 0.0
    %332 = vmatpush1.msra.mxu0 0.0
    %333 = vmatprep.subr.mxu0 0.0
    %334 = vmatpush1.msra.mxu0 0.0
    %335 = vmatprep.subr.mxu0 0.0
    %336 = vmatpush1.msra.mxu0 0.0
    %337 = vmatprep.subr.mxu0 0.0
    %338 = vmatpush1.msra.mxu0 0.0
    %339 = vmatprep.subr.mxu0 0.0
    %340 = vmatpush1.msra.mxu0 %v300
    %341 = vmatprep.subr.mxu0 0.0
    %342 = vmatpush1.msra.mxu0 %v299
    %343 = vmatprep.subr.mxu0 0.0
    %344 = vmatpush2.msra.mxu0 0.0
    %345 = vmatprep.subr.mxu0 0.0
    %346 = vmatpush2.msra.mxu0 0.0
    %347 = vmatprep.subr.mxu0 0.0
    %348 = vmatpush2.msra.mxu0 0.0
    %349 = vmatprep.subr.mxu0 0.0
    %350 = vmatpush2.msra.mxu0 0.0
    %351 = vmatprep.subr.mxu0 0.0
    %352 = vmatpush2.msra.mxu0 0.0
    %353 = vmatprep.subr.mxu0 0.0
    %354 = vmatpush2.msra.mxu0 0.0
    %355 = vmatprep.subr.mxu0 0.0
    %356 = vmatpush2.msra.mxu0 0.0
    %357 = vmatprep.subr.mxu0 0.0
    %358 = vmatpush2.msra.mxu0 0.0
    %359 = vmatprep.subr.mxu0 0.0
    %360 = vmatpush2.msra.mxu0 0.0
    %361 = vmatprep.subr.mxu0 0.0
    %362 = vmatpush2.msra.mxu0 0.0
    %363 = vmatprep.subr.mxu0 0.0
    %364 = vmatpush2.msra.mxu0 0.0
    %365 = vmatprep.subr.mxu0 0.0
    %366 = vmatpush2.msra.mxu0 0.0
    %367 = vmatprep.subr.mxu0 0.0
    %368 = vmatpush2.msra.mxu0 0.0
    %369 = vmatprep.subr.mxu0 0.0
    %370 = vmatpush2.msra.mxu0 0.0
    %371 = vmatprep.subr.mxu0 0.0
    %372 = vmatpush2.msra.mxu0 0.0
    %373 = vmatprep.subr.mxu0 0.0
    %374 = vmatpush2.msra.mxu0 0.0
    %375 = vmatprep.mubr.f32.mxu0 0.0
    %376 = vmatmul.mubr.f32.gmra.mxu0 %v309
    %v377 = vpop.f32.mrf.mxu0
    %v378 = vadd.f32 %v306, %v377
    %v379 = vpop.f32.mrf.mxu0
    %380 = vdwg.mxu0
    %v381 = vmul.f32 %v378, 0.5
    %v382 = vmul.f32 %v381, 1.442695
    %v383 = vpow.pop %v382
    %v384 = vld [vmem:[%s1] sm:$0xff]
    %386 = vrot.lane.b32.xlu0 %v384, 8
    %v387 = vpop.permute.xlu0 %386
    %v389 = vmul.f32 %v383, %v387
    %391 = vrot.lane.b32.xlu0 %v389, 120
    %v392 = vpop.permute.xlu0 %391
    %v394 = vadd.f32 %v378, %v392
    %vm395 = vcmask 64512
    %396 = vst.msk [vmem:[#allocation2] sm:$0xff] %vm395, %v394
    %v397 = vadd.f32 %v378, 1.0
    %v398 = vmul.f32 %v378, %v378
    %400 = vrot.lane.b32.xlu0 %v398, 8
    %v401 = vpop.permute.xlu0 %400
    %v403 = vsub.f32 %v397, %v401
    %v404 = vmul.f32 %v378, 1.442695
    %v405 = vpow.pop %v404
    %v406 = vsub.f32 %v403, %v405
    %408 = vrot.lane.b32.xlu0 %v406, 120
    %v409 = vpop.permute.xlu0 %408
    %v411 = vsel %vm395, %v409, 0.0
    %412 = vadd.xlane.f32.xlu0 %v411
    %v413 = vpop.xlane.xlu0 %412
    %v414 = vmul.f32 %v413, -0.5
    %vm415 = vcmask 7168
    %416 = vst.msk [vmem:[%s11] sm:$0xff] %vm415, %v414
    // Predicated region
    $region42: #{tpu_custom_call.1} parent=1 // pred_check
      _
    $region43: #{tpu_custom_call.1} parent=1 // pred_check_branch
      %418 = sbr.rel (0) target = $region45
    $region44: #{tpu_custom_call.1} parent=1 // pred_region
      %s420 = ssub.s32 128, 128
      %421 = vsyncadd [#allocation3], %s420
      %s423 = sshll.u32 [#allocation2], 4
      %s424 = int_to_ptr.vmem [resolvable:$true] %s423
      %426 = dma.vmem_to_hbm [thread:$0]  %s424, 128, %s10, [#allocation3]
    $region45: #{tpu_custom_call.1} parent=1 // pred_fallthru
      _
    // Predicated region
    $region46: #{tpu_custom_call.1} parent=1 // pred_check
      _
    $region47: #{tpu_custom_call.1} parent=1 // pred_check_branch
      %428 = sbr.rel (0) target = $region49
    $region48: #{tpu_custom_call.1} parent=1 // pred_region
      _
    $region49: #{tpu_custom_call.1} parent=1 // pred_fallthru
      _
    // Predicated region
    $region50: #{tpu_custom_call.1} parent=1 // pred_check
      _
    $region51: #{tpu_custom_call.1} parent=1 // pred_check_branch
      %430 = sbr.rel (0) target = $region53
    $region52: #{tpu_custom_call.1} parent=1 // pred_region
      %431 = dma.done [#allocation3], 128
    $region53: #{tpu_custom_call.1} parent=1 // pred_fallthru
      _
    // Predicated region
    $region54: #{tpu_custom_call.1} parent=1 // pred_check
      _
    $region55: #{tpu_custom_call.1} parent=1 // pred_check_branch
      %433 = sbr.rel (0) target = $region57
    $region56: #{tpu_custom_call.1} parent=1 // pred_region
      _
    $region57: #{tpu_custom_call.1} parent=1 // pred_fallthru
      _
    %434 = vsyncpa [#allocation3], 1

</llo_original>
